<compile_context>
chip_gen: v7x
topology: tpu7x:2x2x1
jax: 0.10.0
libtpu: 0.0.40
codegen_flags: <defaults>
</compile_context>

<pallas_src>
import functools

import jax
import jax.numpy as jnp
from jax.experimental import pallas as pl
from jax.experimental.pallas import tpu as pltpu


# --------------------------------------------------------------------------- #
# Helpers
# --------------------------------------------------------------------------- #
def _round_up(a, b):
    return (a + b - 1) // b * b


def _vmem_capacity_bytes():
    """Physical VMEM per TensorCore; conservative fallback if the query fails."""
    try:
        return int(pltpu.get_tpu_info().vmem_capacity_bytes)
    except Exception:
        # Hardware query unavailable (e.g. AOT tracing off-TPU) -> assume the
        # smallest current generation (v7x: 64 MiB per TensorCore).
        return 64 << 20


def _pick_tile_ff(ff_dim, max_chunk):
    """Return (tile_ff, padded_ff).  Prefer a clean divisor; otherwise pad ff."""
    if ff_dim <= max_chunk:
        return ff_dim, ff_dim                       # single chunk, no padding
    c = max(128, (max_chunk // 128) * 128)
    d = c
    while d >= max(128, c // 2):                    # look for a clean divisor
        if ff_dim % d == 0:
            return d, ff_dim
        d -= 128
    return c, _round_up(ff_dim, c)                  # pad one extra chunk's worth


# --------------------------------------------------------------------------- #
# Kernels
# --------------------------------------------------------------------------- #
def _ffn_kernel_direct(x_ref, w1_ref, b1_ref, w2_ref, b2_ref, o_ref):
    # Output is float32 and its block index is constant along the ff axis, so
    # the resident output block doubles as the fp32 accumulator (no scratch).
    j = pl.program_id(1)

    @pl.when(j == 0)
    def _():
        o_ref[...] = jnp.zeros_like(o_ref)

    x = x_ref[...].astype(w1_ref.dtype)             # in-kernel cast (VPU), no extra HBM pass
    h = jnp.dot(x, w1_ref[...], preferred_element_type=jnp.float32)
    h = jnp.maximum(h + b1_ref[...], 0.0)
    # TODO(synk): dropout is identity in eval mode; a training-mode kernel would
    # build a keep mask here via pltpu.prng_seed + pltpu.prng_random_bits.
    o_ref[...] += jnp.dot(h.astype(w2_ref.dtype), w2_ref[...],
                          preferred_element_type=jnp.float32)

    @pl.when(j == pl.num_programs(1) - 1)
    def _():
        o_ref[...] += b2_ref[...]


def _ffn_kernel_scratch(x_ref, w1_ref, b1_ref, w2_ref, b2_ref, o_ref, acc_ref):
    # Non-f32 output: accumulate in an fp32 VMEM scratch, cast on final store.
    j = pl.program_id(1)

    @pl.when(j == 0)
    def _():
        acc_ref[...] = jnp.zeros_like(acc_ref)

    x = x_ref[...].astype(w1_ref.dtype)
    h = jnp.dot(x, w1_ref[...], preferred_element_type=jnp.float32)
    h = jnp.maximum(h + b1_ref[...], 0.0)
    acc_ref[...] += jnp.dot(h.astype(w2_ref.dtype), w2_ref[...],
                            preferred_element_type=jnp.float32)

    @pl.when(j == pl.num_programs(1) - 1)
    def _():
        o_ref[...] = (acc_ref[...] + b2_ref[...]).astype(o_ref.dtype)


# --------------------------------------------------------------------------- #
# pallas_call builder
# --------------------------------------------------------------------------- #
@functools.partial(
    jax.jit,
    static_argnames=("tile_m", "tile_ff", "out_dtype", "use_scratch", "vmem_limit"))
def _ffn_pallas(x2, w1p, b1p, w2p, b2p, *, tile_m, tile_ff, out_dtype,
                use_scratch, vmem_limit):
    n_pad, embed = x2.shape
    num_ff = w1p.shape[0]
    ff_pad = num_ff * tile_ff
    cbytes = w1p.dtype.itemsize
    out_itemsize = jnp.dtype(out_dtype).itemsize
    row_tiles = n_pad // tile_m

    # Honest traffic estimate: W1/W2 (and b1) are re-streamed once per row tile
    # whenever there is more than one ff chunk (inner "arbitrary" grid axis).
    w_passes = 1 if num_ff == 1 else row_tiles
    flops = 4 * n_pad * embed * ff_pad
    bytes_accessed = (n_pad * embed * (x2.dtype.itemsize + out_itemsize)
                      + w_passes * 2 * embed * ff_pad * cbytes
                      + w_passes * (ff_pad + embed) * 4)

    in_specs = [
        pl.BlockSpec((tile_m, embed), lambda i, j: (i, 0)),            # x row tile
        pl.BlockSpec((None, embed, tile_ff), lambda i, j: (j, 0, 0)),  # W1 chunk (contiguous)
        pl.BlockSpec((1, tile_ff), lambda i, j: (0, j)),               # b1 chunk (fp32)
        pl.BlockSpec((tile_ff, embed), lambda i, j: (j, 0)),           # W2 chunk
        pl.BlockSpec((1, embed), lambda i, j: (0, 0)),                 # b2 (fp32)
    ]
    out_spec = pl.BlockSpec((tile_m, embed), lambda i, j: (i, 0))

    kernel = _ffn_kernel_scratch if use_scratch else _ffn_kernel_direct
    scratch = [pltpu.VMEM((tile_m, embed), jnp.float32)] if use_scratch else []

    return pl.pallas_call(
        kernel,
        out_shape=jax.ShapeDtypeStruct((n_pad, embed), out_dtype),
        grid_spec=pltpu.PrefetchScalarGridSpec(
            num_scalar_prefetch=0,
            grid=(row_tiles, num_ff),            # rows parallel, ff = reduction (innermost)
            in_specs=in_specs,
            out_specs=out_spec,
            scratch_shapes=scratch),
        compiler_params=pltpu.CompilerParams(
            dimension_semantics=("parallel", "arbitrary"),
            vmem_limit_bytes=int(vmem_limit)),
        cost_estimate=pl.CostEstimate(flops=int(flops), transcendentals=0,
                                      bytes_accessed=int(bytes_accessed)),
    )(x2, w1p, b1p, w2p, b2p)


# --------------------------------------------------------------------------- #
# Module wrapper (weights prepared once)
# --------------------------------------------------------------------------- #
class PositionwiseFeedForwardPallas:
    """y = linear2(relu(linear1(x))); dropout is identity (eval mode).

    w1: (embed, ff), w2: (ff, embed) (i.e. torch weights transposed).
    compute_dtype=jnp.bfloat16 (default) runs both matmuls in bf16 on the MXU
    with fp32 accumulation; pass jnp.float32 for a full-precision path.
    """

    def __init__(self, w1, b1, w2, b2, *, compute_dtype=jnp.bfloat16,
                 tile_m=None, max_ff_chunk=None):
        embed, ff = w1.shape
        assert w2.shape == (ff, embed), "w2 must be (ff_dim, embed_dim)"
        self.embed_dim, self.ff_dim = embed, ff
        self.compute_dtype = jnp.dtype(compute_dtype)
        cbytes = self.compute_dtype.itemsize

        # --- generation-aware VMEM budget ---------------------------------- #
        self._vmem_cap_raw = _vmem_capacity_bytes()
        # Never request more scoped VMEM than the chip has (v7x: 64 MiB/TC).
        self._vmem_cap = min(int(self._vmem_cap_raw * 0.8), 100 << 20)

        # --- ff chunking ----------------------------------------------------#
        if max_ff_chunk is None:
            # Budget for double-buffered W1+W2 chunks: 4 * E * tile_ff * cbytes.
            w_budget = (20 << 20) if self._vmem_cap_raw <= (64 << 20) else (48 << 20)
            max_ff_chunk = max(128, (w_budget // (4 * embed * cbytes)) // 128 * 128)
        tf, ff_pad = _pick_tile_ff(ff, int(max_ff_chunk))
        self.tile_ff, self.ff_pad = tf, ff_pad
        self.num_ff = ff_pad // tf

        # --- one-time weight prep: cast + pad + chunk-contiguous repack -----#
        w1c = jnp.asarray(w1, self.compute_dtype)
        w2c = jnp.asarray(w2, self.compute_dtype)
        b1c = jnp.asarray(b1, jnp.float32).reshape(1, ff)
        if ff_pad != ff:
            w1c = jnp.pad(w1c, ((0, 0), (0, ff_pad - ff)))
            w2c = jnp.pad(w2c, ((0, ff_pad - ff), (0, 0)))
            b1c = jnp.pad(b1c, ((0, 0), (0, ff_pad - ff)))
        # (E, ff_pad) -> (num_ff, E, tile_ff): each ff chunk is one contiguous slab.
        self.w1p = w1c.reshape(embed, self.num_ff, tf).transpose(1, 0, 2)
        self.w2p = w2c
        self.b1p = b1c
        self.b2p = jnp.asarray(b2, jnp.float32).reshape(1, embed)

        # Row-tile target: >=~768 keeps weight re-streaming off the HBM roofline
        # on v6e/v7x; small N collapses to a single small tile anyway.
        self.target_tile_m = 768 if tile_m is None else int(tile_m)

    # ---------------------------------------------------------------------- #
    def _vmem_estimate(self, tm, x_itemsize, out_itemsize):
        e, tf = self.embed_dim, self.tile_ff
        cbytes = self.compute_dtype.itemsize
        est = (4 * e * tf * cbytes                 # W1+W2 chunks, double-buffered
               + 2 * (tf + e) * 4                  # fp32 biases, double-buffered
               + 2 * tm * e * x_itemsize           # x tiles (double-buffered)
               + 2 * tm * e * out_itemsize         # out tiles (double-buffered)
               + tm * e * 4                        # fp32 accumulator / resident out
               + tm * tf * 4)                      # relu intermediate (fp32)
        return int(est * 1.3) + (2 << 20)

    def _pick_tile_m(self, n, x_itemsize, out_itemsize):
        pack = 16 if (x_itemsize < 4 or self.compute_dtype.itemsize < 4) else 8
        tm = min(self.target_tile_m, _round_up(n, pack))
        if self._vmem_cap_raw <= (64 << 20) and n >= 512:
            # v7x: keep >=2 row tiles so the parallel axis splits across both TCs.
            tm = min(tm, max(128, _round_up((n + 1) // 2, 128)))
        if tm >= 128:
            tm = (tm // 128) * 128                 # MXU-aligned, lane-dense stores
        tm = max(tm, pack)
        while tm > 128 and self._vmem_estimate(tm, x_itemsize, out_itemsize) > self._vmem_cap:
            tm -= 128
        return tm, self._vmem_estimate(tm, x_itemsize, out_itemsize)

    # ---------------------------------------------------------------------- #
    def __call__(self, x):
        lead = x.shape[:-1]
        embed = x.shape[-1]
        assert embed == self.embed_dim
        out_dtype = jnp.dtype(x.dtype)
        n = 1
        for d in lead:
            n *= int(d)

        x_itemsize = jnp.dtype(x.dtype).itemsize
        out_itemsize = out_dtype.itemsize
        tm, est = self._pick_tile_m(n, x_itemsize, out_itemsize)
        n_pad = _round_up(n, tm)

        x2 = x.reshape(n, embed)
        if n_pad != n:
            # TODO(synk): a masked last row tile (pl.cdiv grid) would avoid this copy.
            x2 = jnp.pad(x2, ((0, n_pad - n), (0, 0)))

        use_scratch = out_dtype != jnp.dtype(jnp.float32)
        vmem_limit = int(min(max(est, 32 << 20), self._vmem_cap))

        out2 = _ffn_pallas(x2, self.w1p, self.b1p, self.w2p, self.b2p,
                           tile_m=tm, tile_ff=self.tile_ff,
                           out_dtype=out_dtype, use_scratch=use_scratch,
                           vmem_limit=vmem_limit)
        return out2[:n].reshape(*lead, embed)


# --------------------------------------------------------------------------- #
# Demo / correctness check
# --------------------------------------------------------------------------- #
if __name__ == "__main__":
    batch, seq, embed_dim, ff_dim = 2, 8, 32, 64

    key = jax.random.PRNGKey(0)
    kx, k1, k2, k3, k4 = jax.random.split(key, 5)
    lim1 = 1.0 / (embed_dim ** 0.5)
    lim2 = 1.0 / (ff_dim ** 0.5)
    x = jax.random.normal(kx, (batch, seq, embed_dim), jnp.float32)
    # nn.Linear-style init, stored as (in_dim, out_dim) so the kernel does x @ W.
    w1 = jax.random.uniform(k1, (embed_dim, ff_dim), jnp.float32, -lim1, lim1)
    b1 = jax.random.uniform(k2, (ff_dim,), jnp.float32, -lim1, lim1)
    w2 = jax.random.uniform(k3, (ff_dim, embed_dim), jnp.float32, -lim2, lim2)
    b2 = jax.random.uniform(k4, (embed_dim,), jnp.float32, -lim2, lim2)

    ref = jnp.maximum(x @ w1 + b1, 0.0) @ w2 + b2

    # fp32 compute path (tight check, direct-output accumulation kernel).
    ffn_f32 = PositionwiseFeedForwardPallas(w1, b1, w2, b2, compute_dtype=jnp.float32)
    out_f32 = jax.block_until_ready(ffn_f32(x))
    assert out_f32.shape == (batch, seq, embed_dim)
    assert jnp.allclose(out_f32, ref, atol=1e-5, rtol=1e-5), "fp32 mismatch vs reference"

    # Default mixed-precision path: bf16 matmuls, fp32 accumulation, cached bf16 weights.
    ffn = PositionwiseFeedForwardPallas(w1, b1, w2, b2)
    out_mx = jax.block_until_ready(ffn(x))
    assert out_mx.dtype == x.dtype
    assert jnp.allclose(out_mx, ref, atol=5e-2, rtol=5e-2), "bf16 mismatch vs reference"

    # bf16 activations/output: exercises the fp32-scratch writeback kernel.
    out_b = jax.block_until_ready(ffn(x.astype(jnp.bfloat16)))
    assert out_b.dtype == jnp.bfloat16
    assert jnp.allclose(out_b.astype(jnp.float32), ref, atol=2.5e-1, rtol=1e-1), \
        "bf16-out mismatch vs reference"

    print("KERNEL_OK")
</pallas_src>

<mosaic_0001>
module attributes {stable_mosaic.version = 11 : i64} {
  func.func @_ffn_kernel_direct(%arg0: i32, %arg1: i32, %arg2: memref<16x32xf32, #tpu.memory_space<vmem>>, %arg3: memref<1x32x64xf32, #tpu.memory_space<vmem>>, %arg4: memref<1x64xf32, #tpu.memory_space<vmem>>, %arg5: memref<64x32xf32, #tpu.memory_space<vmem>>, %arg6: memref<1x32xf32, #tpu.memory_space<vmem>>, %arg7: memref<16x32xf32, #tpu.memory_space<vmem>>) attributes {dimension_semantics = [#tpu.dimension_semantics<parallel>, #tpu.dimension_semantics<arbitrary>], iteration_bounds = array<i64: 1, 1>, scalar_prefetch = 0 : i64, scratch_operands = 0 : i64, tpu.core_type = #tpu.core_type<tc>, window_params = [{transform_indices = @transform_0, window_bounds = array<i64: 16, 32>}, {transform_indices = @transform_1, window_bounds = array<i64: 1, 32, 64>}, {transform_indices = @transform_2, window_bounds = array<i64: 1, 64>}, {transform_indices = @transform_3, window_bounds = array<i64: 64, 32>}, {pipeline_mode = #tpu.pipeline_mode<synchronous>, transform_indices = @transform_4, window_bounds = array<i64: 1, 32>}, {transform_indices = @transform_5, window_bounds = array<i64: 16, 32>}]} {
    %c0_i32 = arith.constant 0 : i32
    %0 = arith.cmpi eq, %arg1, %c0_i32 : i32
    %1 = arith.extui %0 : i1 to i32
    %c0_i32_0 = arith.constant 0 : i32
    %2 = arith.cmpi ne, %1, %c0_i32_0 : i32
    scf.if %2 {
      %cst_17 = arith.constant 0.000000e+00 : f32
      %20 = vector.broadcast %cst_17 : f32 to vector<16x32xf32>
      %c0_18 = arith.constant 0 : index
      %c0_19 = arith.constant 0 : index
      %21 = vector.load %arg7[%c0_18, %c0_19] : memref<16x32xf32, #tpu.memory_space<vmem>>, vector<16x32xf32>
      tpu.vector_store %arg7[%c0_18, %c0_19], %20 {strides = array<i32>} : memref<16x32xf32, #tpu.memory_space<vmem>>, vector<16x32xf32>,
    } else {
    }
    %c0 = arith.constant 0 : index
    %c0_1 = arith.constant 0 : index
    %3 = vector.load %arg2[%c0, %c0_1] : memref<16x32xf32, #tpu.memory_space<vmem>>, vector<16x32xf32>
    %c0_2 = arith.constant 0 : index
    %c0_3 = arith.constant 0 : index
    %c0_4 = arith.constant 0 : index
    %4 = vector.load %arg3[%c0_2, %c0_3, %c0_4] : memref<1x32x64xf32, #tpu.memory_space<vmem>>, vector<1x32x64xf32>
    %5 = vector.shape_cast %4 : vector<1x32x64xf32> to vector<32x64xf32>
    %cst = arith.constant dense<0.000000e+00> : vector<16x64xf32>
    %6 = tpu.matmul %3, %5, %cst {dimension_numbers = #tpu.dot_dimension_numbers<[1], [0], [0], [1], [0, 0, 1, 1], [], []>} : vector<16x32xf32>, vector<32x64xf32>, vector<16x64xf32> -> vector<16x64xf32>
    %c0_5 = arith.constant 0 : index
    %c0_6 = arith.constant 0 : index
    %7 = vector.load %arg4[%c0_5, %c0_6] : memref<1x64xf32, #tpu.memory_space<vmem>>, vector<1x64xf32>
    %8 = vector.broadcast %7 : vector<1x64xf32> to vector<16x64xf32>
    %9 = arith.addf %6, %8 : vector<16x64xf32>
    %cst_7 = arith.constant 0.000000e+00 : f32
    %10 = vector.broadcast %cst_7 : f32 to vector<16x64xf32>
    %11 = arith.maximumf %9, %10 : vector<16x64xf32>
    %c0_8 = arith.constant 0 : index
    %c0_9 = arith.constant 0 : index
    %12 = vector.load %arg7[%c0_8, %c0_9] : memref<16x32xf32, #tpu.memory_space<vmem>>, vector<16x32xf32>
    %c0_10 = arith.constant 0 : index
    %c0_11 = arith.constant 0 : index
    %13 = vector.load %arg5[%c0_10, %c0_11] : memref<64x32xf32, #tpu.memory_space<vmem>>, vector<64x32xf32>
    %cst_12 = arith.constant dense<0.000000e+00> : vector<16x32xf32>
    %14 = tpu.matmul %11, %13, %cst_12 {dimension_numbers = #tpu.dot_dimension_numbers<[1], [0], [0], [1], [0, 0, 1, 1], [], []>} : vector<16x64xf32>, vector<64x32xf32>, vector<16x32xf32> -> vector<16x32xf32>
    %15 = arith.addf %12, %14 : vector<16x32xf32>
    %c0_13 = arith.constant 0 : index
    %c0_14 = arith.constant 0 : index
    %16 = vector.load %arg7[%c0_13, %c0_14] : memref<16x32xf32, #tpu.memory_space<vmem>>, vector<16x32xf32>
    tpu.vector_store %arg7[%c0_13, %c0_14], %15 {strides = array<i32>} : memref<16x32xf32, #tpu.memory_space<vmem>>, vector<16x32xf32>,
    %c0_i32_15 = arith.constant 0 : i32
    %17 = arith.cmpi eq, %arg1, %c0_i32_15 : i32
    %18 = arith.extui %17 : i1 to i32
    %c0_i32_16 = arith.constant 0 : i32
    %19 = arith.cmpi ne, %18, %c0_i32_16 : i32
    scf.if %19 {
      %c0_17 = arith.constant 0 : index
      %c0_18 = arith.constant 0 : index
      %20 = vector.load %arg7[%c0_17, %c0_18] : memref<16x32xf32, #tpu.memory_space<vmem>>, vector<16x32xf32>
      %c0_19 = arith.constant 0 : index
      %c0_20 = arith.constant 0 : index
      %21 = vector.load %arg6[%c0_19, %c0_20] : memref<1x32xf32, #tpu.memory_space<vmem>>, vector<1x32xf32>
      %22 = vector.broadcast %21 : vector<1x32xf32> to vector<16x32xf32>
      %23 = arith.addf %20, %22 : vector<16x32xf32>
      %c0_21 = arith.constant 0 : index
      %c0_22 = arith.constant 0 : index
      %24 = vector.load %arg7[%c0_21, %c0_22] : memref<16x32xf32, #tpu.memory_space<vmem>>, vector<16x32xf32>
      tpu.vector_store %arg7[%c0_21, %c0_22], %23 {strides = array<i32>} : memref<16x32xf32, #tpu.memory_space<vmem>>, vector<16x32xf32>,
    } else {
    }
    return
  }
  func.func @transform_0(%arg0: i32, %arg1: i32) -> (i32, i32) {
    %c0_i32 = arith.constant 0 : i32
    %c0_i32_0 = arith.constant 0 : i32
    return %arg0, %c0_i32 : i32, i32
  }
  func.func @transform_1(%arg0: i32, %arg1: i32) -> (i32, i32, i32) {
    %c0_i32 = arith.constant 0 : i32
    %c0_i32_0 = arith.constant 0 : i32
    %c0_i32_1 = arith.constant 0 : i32
    return %arg1, %c0_i32, %c0_i32_0 : i32, i32, i32
  }
  func.func @transform_2(%arg0: i32, %arg1: i32) -> (i32, i32) {
    %c0_i32 = arith.constant 0 : i32
    %c0_i32_0 = arith.constant 0 : i32
    return %c0_i32, %arg1 : i32, i32
  }
  func.func @transform_3(%arg0: i32, %arg1: i32) -> (i32, i32) {
    %c0_i32 = arith.constant 0 : i32
    %c0_i32_0 = arith.constant 0 : i32
    return %arg1, %c0_i32 : i32, i32
  }
  func.func @transform_4(%arg0: i32, %arg1: i32) -> (i32, i32) {
    %c0_i32 = arith.constant 0 : i32
    %c0_i32_0 = arith.constant 0 : i32
    %c0_i32_1 = arith.constant 0 : i32
    return %c0_i32, %c0_i32_0 : i32, i32
  }
  func.func @transform_5(%arg0: i32, %arg1: i32) -> (i32, i32) {
    %c0_i32 = arith.constant 0 : i32
    %c0_i32_0 = arith.constant 0 : i32
    return %arg0, %c0_i32 : i32, i32
  }
}

</mosaic_0001>

<llo_original>
// kernel: _ffn_pallas.1
$region0: #{_ffn_pallas.1}
  #allocation0 [shape = 'u32[]', space=smem, size = 0x4, offset = 0x4, fixed_abs, tag = 'smem constant byte address 0x4 - core index']
  #allocation1 [shape = 'u32[144,128]{1,0:T(1,128)}', space=vmem, size = 0x12000, scoped, tag = 'internal scratch']
  %s0 = inlined_call_operand.vmem [shape: f32[16,32], index: 0, kind: input, shape index: {}]
  %s1 = inlined_call_operand.vmem [shape: f32[1,32,64], index: 1, kind: input, shape index: {}]
  %s2 = inlined_call_operand.vmem [shape: f32[1,64], index: 2, kind: input, shape index: {}]
  %s3 = inlined_call_operand.vmem [shape: f32[64,32], index: 3, kind: input, shape index: {}]
  %s4 = inlined_call_operand.vmem [shape: f32[1,32], index: 4, kind: input, shape index: {}]
  %s5 = inlined_call_operand.hbm [shape: f32[16,32], index: 5, kind: output, shape index: {}]
  %s6 = sld [smem:[#allocation0]]
  $region38: #{_ffn_pallas.1} parent=0
    _
  %s8 = ssub.s32 1, %s6
  %s9 = scalar_select 0, %s8, %s6
  $region1: #{_ffn_pallas.1} parent=0
    #allocation2 [shape = 'u8[8192]{0}', space=vmem, size = 0x2000, scoped, tag = 'output window, operand 0, single buffered']
    #allocation3 [shape = 's32[1]{0}', space=sflag, size = 0x4, scoped, tag = 'scoped memory for _ffn_pallas.1']
    %10 = vsyncpa [#allocation3], 0
    // Predicated region
    $region2: #{_ffn_pallas.1} parent=1 // pred_check
      _
    $region3: #{_ffn_pallas.1} parent=1 // pred_check_branch
      %12 = sbr.rel (0) target = $region5
    $region4: #{_ffn_pallas.1} parent=1 // pred_region
      _
    $region5: #{_ffn_pallas.1} parent=1 // pred_fallthru
      _
    // Predicated region
    $region6: #{_ffn_pallas.1} parent=1 // pred_check
      _
    $region7: #{_ffn_pallas.1} parent=1 // pred_check_branch
      %14 = sbr.rel (0) target = $region9
    $region8: #{_ffn_pallas.1} parent=1 // pred_region
      _
    $region9: #{_ffn_pallas.1} parent=1 // pred_fallthru
      _
    // Predicated region
    $region10: #{_ffn_pallas.1} parent=1 // pred_check
      _
    $region11: #{_ffn_pallas.1} parent=1 // pred_check_branch
      %16 = sbr.rel (0) target = $region13
    $region12: #{_ffn_pallas.1} parent=1 // pred_region
      _
    $region13: #{_ffn_pallas.1} parent=1 // pred_fallthru
      _
    // Predicated region
    $region14: #{_ffn_pallas.1} parent=1 // pred_check
      _
    $region15: #{_ffn_pallas.1} parent=1 // pred_check_branch
      %18 = sbr.rel (0) target = $region17
    $region16: #{_ffn_pallas.1} parent=1 // pred_region
      _
    $region17: #{_ffn_pallas.1} parent=1 // pred_fallthru
      _
    // Predicated region
    $region18: #{_ffn_pallas.1} parent=1 // pred_check
      _
    $region19: #{_ffn_pallas.1} parent=1 // pred_check_branch
      %20 = sbr.rel (0) target = $region21
    $region20: #{_ffn_pallas.1} parent=1 // pred_region
      _
    $region21: #{_ffn_pallas.1} parent=1 // pred_fallthru
      _
    %p21 = scmp.eq.s32.totalorder 0, 0
    // Predicated region
    $region22: #{_ffn_pallas.1} parent=1 // pred_check
      %p22 = pneg %p21
    $region23: #{_ffn_pallas.1} parent=1 // pred_check_branch
      %24 = sbr.rel (%p22) target = $region25
    $region24: #{_ffn_pallas.1} parent=1 // pred_region
      %vm25 = vcmask 261120
      %26 = vst.msk [vmem:[#allocation2] sm:$0xff] %vm25, 0.0
      %27 = vst.msk [vmem:[#allocation2 + $0x8] sm:$0xff] %vm25, 0.0
    $region25: #{_ffn_pallas.1} parent=1 // pred_fallthru
      _
    %v28 = vld [vmem:[%s0] sm:$0xff]
    %v29 = vld [vmem:[%s0 + $0x8] sm:$0xff]
    %v30 = vld [vmem:[%s1] sm:$0xff]
    %v31 = vld [vmem:[%s1 + $0x8] sm:$0xff]
    %v32 = vld [vmem:[%s1 + $0x10] sm:$0xff]
    %v33 = vld [vmem:[%s1 + $0x18] sm:$0xff]
    %v34 = vld [vmem:[%s2] sm:$0x1]
    %v36 = vlaneseq
    %v37 = vshrl.u32 %v36, 7
    %v38 = vsub.s32 0, %v37
    %v39 = vrot.slane %v34, %v38
    %vm41 = vcmask 261120
    %v43 = vsel %vm41, %v28, 0
    %v46 = vsel %vm41, %v29, 0
    %48 = vmatprep.subr.mxu0 0.0
    %49 = vmatpush1.msra.mxu0 %v30
    %50 = vmatprep.subr.mxu0 0.0
    %51 = vmatpush1.msra.mxu0 %v31
    %52 = vmatprep.subr.mxu0 0.0
    %53 = vmatpush1.msra.mxu0 %v32
    %54 = vmatprep.subr.mxu0 0.0
    %55 = vmatpush1.msra.mxu0 %v33
    %56 = vmatprep.subr.mxu0 0.0
    %57 = vmatpush1.msra.mxu0 0.0
    %58 = vmatprep.subr.mxu0 0.0
    %59 = vmatpush1.msra.mxu0 0.0
    %60 = vmatprep.subr.mxu0 0.0
    %61 = vmatpush1.msra.mxu0 0.0
    %62 = vmatprep.subr.mxu0 0.0
    %63 = vmatpush1.msra.mxu0 0.0
    %64 = vmatprep.subr.mxu0 0.0
    %65 = vmatpush1.msra.mxu0 0.0
    %66 = vmatprep.subr.mxu0 0.0
    %67 = vmatpush1.msra.mxu0 0.0
    %68 = vmatprep.subr.mxu0 0.0
    %69 = vmatpush1.msra.mxu0 0.0
    %70 = vmatprep.subr.mxu0 0.0
    %71 = vmatpush1.msra.mxu0 0.0
    %72 = vmatprep.subr.mxu0 0.0
    %73 = vmatpush1.msra.mxu0 0.0
    %74 = vmatprep.subr.mxu0 0.0
    %75 = vmatpush1.msra.mxu0 0.0
    %76 = vmatprep.subr.mxu0 0.0
    %77 = vmatpush1.msra.mxu0 0.0
    %78 = vmatprep.subr.mxu0 0.0
    %79 = vmatpush1.msra.mxu0 0.0
    %80 = vmatprep.subr.mxu0 0.0
    %81 = vmatpush1.msra.mxu0 0.0
    %82 = vmatprep.subr.mxu0 0.0
    %83 = vmatpush1.msra.mxu0 0.0
    %84 = vmatprep.subr.mxu0 0.0
    %85 = vmatpush1.msra.mxu0 0.0
    %86 = vmatprep.subr.mxu0 0.0
    %87 = vmatpush1.msra.mxu0 0.0
    %88 = vmatprep.subr.mxu0 0.0
    %89 = vmatpush1.msra.mxu0 0.0
    %90 = vmatprep.subr.mxu0 0.0
    %91 = vmatpush1.msra.mxu0 0.0
    %92 = vmatprep.subr.mxu0 0.0
    %93 = vmatpush1.msra.mxu0 0.0
    %94 = vmatprep.subr.mxu0 0.0
    %95 = vmatpush1.msra.mxu0 0.0
    %96 = vmatprep.subr.mxu0 0.0
    %97 = vmatpush1.msra.mxu0 0.0
    %98 = vmatprep.subr.mxu0 0.0
    %99 = vmatpush1.msra.mxu0 0.0
    %100 = vmatprep.subr.mxu0 0.0
    %101 = vmatpush1.msra.mxu0 0.0
    %102 = vmatprep.subr.mxu0 0.0
    %103 = vmatpush1.msra.mxu0 0.0
    %104 = vmatprep.subr.mxu0 0.0
    %105 = vmatpush1.msra.mxu0 0.0
    %106 = vmatprep.subr.mxu0 0.0
    %107 = vmatpush1.msra.mxu0 0.0
    %108 = vmatprep.subr.mxu0 0.0
    %109 = vmatpush1.msra.mxu0 0.0
    %110 = vmatprep.subr.mxu0 0.0
    %111 = vmatpush1.msra.mxu0 0.0
    %112 = vmatprep.mubr.f32.mxu0 0.0
    %113 = vmatmul.mubr.f32.gmra.mrb[0].mxu0 %v43
    %v114 = vpop.f32.mrb[0].mxu0
    %v115 = vadd.f32 %v39, %v114
    %v116 = vpop.f32.mrb[0].mxu0
    %117 = vmatprep.mubr.f32.mxu0 0.0
    %118 = vmatmul.mubr.f32.gmra.mrb[0].mxu0 %v46
    %v119 = vpop.f32.mrb[0].mxu0
    %v120 = vadd.f32 %v39, %v119
    %v121 = vpop.f32.mrb[0].mxu0
    %122 = vdwg.mxu0
    %v123 = vmax.f32 %v115, 0.0
    %v124 = vmax.f32 %v120, 0.0
    %v125 = vld [vmem:[#allocation2] sm:$0xff]
    %v126 = vld [vmem:[#allocation2 + $0x8] sm:$0xff]
    %v127 = vld [vmem:[%s3] sm:$0xff]
    %v128 = vld [vmem:[%s3 + $0x8] sm:$0xff]
    %v129 = vld [vmem:[%s3 + $0x10] sm:$0xff]
    %v130 = vld [vmem:[%s3 + $0x18] sm:$0xff]
    %v131 = vld [vmem:[%s3 + $0x20] sm:$0xff]
    %v132 = vld [vmem:[%s3 + $0x28] sm:$0xff]
    %v133 = vld [vmem:[%s3 + $0x30] sm:$0xff]
    %v134 = vld [vmem:[%s3 + $0x38] sm:$0xff]
    %vm135 = vcmask 523264
    %v137 = vsel %vm135, %v123, 0
    %v140 = vsel %vm135, %v124, 0
    %142 = vmatprep.subr.mxu0 0.0
    %143 = vmatpush1.msra.mxu0 %v127
    %144 = vmatprep.subr.mxu0 0.0
    %145 = vmatpush1.msra.mxu0 %v128
    %146 = vmatprep.subr.mxu0 0.0
    %147 = vmatpush1.msra.mxu0 %v129
    %148 = vmatprep.subr.mxu0 0.0
    %149 = vmatpush1.msra.mxu0 %v130
    %150 = vmatprep.subr.mxu0 0.0
    %151 = vmatpush1.msra.mxu0 %v131
    %152 = vmatprep.subr.mxu0 0.0
    %153 = vmatpush1.msra.mxu0 %v132
    %154 = vmatprep.subr.mxu0 0.0
    %155 = vmatpush1.msra.mxu0 %v133
    %156 = vmatprep.subr.mxu0 0.0
    %157 = vmatpush1.msra.mxu0 %v134
    %158 = vmatprep.subr.mxu0 0.0
    %159 = vmatpush1.msra.mxu0 0.0
    %160 = vmatprep.subr.mxu0 0.0
    %161 = vmatpush1.msra.mxu0 0.0
    %162 = vmatprep.subr.mxu0 0.0
    %163 = vmatpush1.msra.mxu0 0.0
    %164 = vmatprep.subr.mxu0 0.0
    %165 = vmatpush1.msra.mxu0 0.0
    %166 = vmatprep.subr.mxu0 0.0
    %167 = vmatpush1.msra.mxu0 0.0
    %168 = vmatprep.subr.mxu0 0.0
    %169 = vmatpush1.msra.mxu0 0.0
    %170 = vmatprep.subr.mxu0 0.0
    %171 = vmatpush1.msra.mxu0 0.0
    %172 = vmatprep.subr.mxu0 0.0
    %173 = vmatpush1.msra.mxu0 0.0
    %174 = vmatprep.subr.mxu0 0.0
    %175 = vmatpush1.msra.mxu0 0.0
    %176 = vmatprep.subr.mxu0 0.0
    %177 = vmatpush1.msra.mxu0 0.0
    %178 = vmatprep.subr.mxu0 0.0
    %179 = vmatpush1.msra.mxu0 0.0
    %180 = vmatprep.subr.mxu0 0.0
    %181 = vmatpush1.msra.mxu0 0.0
    %182 = vmatprep.subr.mxu0 0.0
    %183 = vmatpush1.msra.mxu0 0.0
    %184 = vmatprep.subr.mxu0 0.0
    %185 = vmatpush1.msra.mxu0 0.0
    %186 = vmatprep.subr.mxu0 0.0
    %187 = vmatpush1.msra.mxu0 0.0
    %188 = vmatprep.subr.mxu0 0.0
    %189 = vmatpush1.msra.mxu0 0.0
    %190 = vmatprep.subr.mxu0 0.0
    %191 = vmatpush1.msra.mxu0 0.0
    %192 = vmatprep.subr.mxu0 0.0
    %193 = vmatpush1.msra.mxu0 0.0
    %194 = vmatprep.subr.mxu0 0.0
    %195 = vmatpush1.msra.mxu0 0.0
    %196 = vmatprep.subr.mxu0 0.0
    %197 = vmatpush1.msra.mxu0 0.0
    %198 = vmatprep.subr.mxu0 0.0
    %199 = vmatpush1.msra.mxu0 0.0
    %200 = vmatprep.subr.mxu0 0.0
    %201 = vmatpush1.msra.mxu0 0.0
    %202 = vmatprep.subr.mxu0 0.0
    %203 = vmatpush1.msra.mxu0 0.0
    %204 = vmatprep.subr.mxu0 0.0
    %205 = vmatpush1.msra.mxu0 0.0
    %206 = vmatprep.mubr.f32.mxu0 0.0
    %207 = vmatmul.mubr.f32.gmra.mrb[0].mxu0 %v137
    %v208 = vpop.f32.mrb[0].mxu0
    %v209 = vadd.f32 0.0, %v208
    %v210 = vpop.f32.mrb[0].mxu0
    %211 = vmatprep.mubr.f32.mxu0 0.0
    %212 = vmatmul.mubr.f32.gmra.mrb[0].mxu0 %v140
    %v213 = vpop.f32.mrb[0].mxu0
    %v214 = vadd.f32 0.0, %v213
    %v215 = vpop.f32.mrb[0].mxu0
    %216 = vdwg.mxu0
    %v217 = vadd.f32 %v125, %v209
    %v218 = vadd.f32 %v126, %v214
    %219 = vst.msk [vmem:[#allocation2] sm:$0xff] %vm41, %v217
    %220 = vst.msk [vmem:[#allocation2 + $0x8] sm:$0xff] %vm41, %v218
    // Predicated region
    $region26: #{_ffn_pallas.1} parent=1 // pred_check
      %p221 = pneg %p21
    $region27: #{_ffn_pallas.1} parent=1 // pred_check_branch
      %223 = sbr.rel (%p221) target = $region29
    $region28: #{_ffn_pallas.1} parent=1 // pred_region
      %v224 = vld [vmem:[#allocation2] sm:$0xff]
      %v225 = vld [vmem:[#allocation2 + $0x8] sm:$0xff]
      %v226 = vld [vmem:[%s4] sm:$0x1]
      %v228 = vlaneseq
      %v229 = vshrl.u32 %v228, 7
      %v230 = vsub.s32 0, %v229
      %v231 = vrot.slane %v226, %v230
      %v233 = vadd.f32 %v224, %v231
      %v234 = vadd.f32 %v225, %v231
      %235 = vst.msk [vmem:[#allocation2] sm:$0xff] %vm41, %v233
      %236 = vst.msk [vmem:[#allocation2 + $0x8] sm:$0xff] %vm41, %v234
    $region29: #{_ffn_pallas.1} parent=1 // pred_fallthru
      _
    // Predicated region
    $region30: #{_ffn_pallas.1} parent=1 // pred_check
      _
    $region31: #{_ffn_pallas.1} parent=1 // pred_check_branch
      %238 = sbr.rel (0) target = $region33
    $region32: #{_ffn_pallas.1} parent=1 // pred_region
      %s240 = ssub.s32 256, 256
      %241 = vsyncadd [#allocation3], %s240
      %s242 = sshll.u32 [#allocation2], 4
      %s243 = int_to_ptr.vmem [resolvable:$true] %s242
      %248 = dma.vmem_to_hbm [thread:$0]  %s243, 256, %s5, [#allocation3], 128, 128, 8
    $region33: #{_ffn_pallas.1} parent=1 // pred_fallthru
      _
    // Predicated region
    $region34: #{_ffn_pallas.1} parent=1 // pred_check
      _
    $region35: #{_ffn_pallas.1} parent=1 // pred_check_branch
      %250 = sbr.rel (0) target = $region37
    $region36: #{_ffn_pallas.1} parent=1 // pred_region
      %251 = dma.done [#allocation3], 256
    $region37: #{_ffn_pallas.1} parent=1 // pred_fallthru
      _
    %252 = vsyncpa [#allocation3], 1

</llo_original>
